<compile_context>
chip_gen: v7x
topology: tpu7x:2x2x1
jax: 0.10.0
libtpu: 0.0.40
codegen_flags: <defaults>
</compile_context>

<pallas_src>
import functools
import jax
import jax.numpy as jnp
from jax.experimental import pallas as pl
from jax.experimental.pallas import tpu as pltpu


# ---------------------------------------------------------------------------
# Pallas kernel: fused matmul + optional per-column scale + shift + ReLU
#   B is bf16 (conv, BN scale pre-folded) or int8 (FC weight-only quant; the
#   dequant scale is the per-column `scale` applied in the f32 epilogue).
# ---------------------------------------------------------------------------

def _mm_fused_kernel(*refs, relu, has_scale, multi_k):
    if has_scale:
        a_ref, b_ref, s_ref, t_ref, o_ref = refs[:5]
        rest = refs[5:]
    else:
        a_ref, b_ref, t_ref, o_ref = refs[:4]
        s_ref = None
        rest = refs[4:]

    b = b_ref[...]
    if b.dtype != jnp.bfloat16:
        b = b.astype(jnp.bfloat16)          # int8 weight dequant (scale applied in epilogue)
    part = jnp.dot(a_ref[...], b, preferred_element_type=jnp.float32)

    def epilogue(y):
        if s_ref is not None:
            y = y * s_ref[...]
        y = y + t_ref[...]
        if relu:
            y = jnp.maximum(y, 0.0)
        o_ref[...] = y.astype(o_ref.dtype)

    if multi_k:
        acc_ref = rest[0]

        @pl.when(pl.program_id(2) == 0)
        def _():
            acc_ref[...] = jnp.zeros_like(acc_ref)

        acc_ref[...] += part

        @pl.when(pl.program_id(2) == pl.num_programs(2) - 1)
        def _():
            epilogue(acc_ref[...])
    else:
        epilogue(part)


# ---------------------------------------------------------------------------
# Tiling helpers
# ---------------------------------------------------------------------------

def _ceil_to(x, m):
    return (x + m - 1) // m * m


def _pick_tm(m):
    """Minimize M padding; keep >=2 M blocks (both v7x TensorCores busy) unless M is tiny."""
    if m <= 8:
        return 8, 8
    nb = max(2, -(-m // 256))
    tm = _ceil_to(-(-m // nb), 8)
    return tm, tm * nb


def _pick_tn(np_):
    if np_ > 1024 and np_ % 1024 == 0:
        return 1024
    return np_


# Single-buffered weight-block budget.  Keeps (double-buffered B) + (in-kernel int8->bf16
# dequant temporary) + A/out/acc comfortably under 44 MiB even on v7x (64 MiB VMEM).
_MAX_B_BLOCK_BYTES = 5 * 1024 * 1024


def _pick_tk(kp, tn, itemsize):
    """Biggest tk that divides kp (multiple of 128) and keeps the B block under budget."""
    steps = 1
    while steps <= kp // 128:
        if kp % steps == 0:
            tk = kp // steps
            if tk % 128 == 0 and tk * tn * itemsize <= _MAX_B_BLOCK_BYTES:
                return tk
        steps += 1
    return 128


def _vmem_limit_bytes():
    """Generation-aware scoped-VMEM limit (v7x only has 64 MiB physical VMEM per TC)."""
    kind = ""
    try:
        kind = jax.devices()[0].device_kind.lower()
    except Exception:
        pass
    if "v5" in kind or "v6" in kind:
        return 96 * 1024 * 1024
    return 44 * 1024 * 1024


# ---------------------------------------------------------------------------
# Fused matmul wrapper
# ---------------------------------------------------------------------------

def fused_matmul_packed(a, b_p, scale_p, shift_p, n_out, *, relu, tn, tk,
                        out_dtype=jnp.float32):
    """act((a @ b_p) [* scale_p] + shift_p); a:(M,K), b_p:(Kp,Np) pre-packed bf16/int8."""
    M, K = a.shape
    Kp, Np = b_p.shape
    tm, Mp = _pick_tm(M)

    ap = jnp.pad(a.astype(jnp.bfloat16), ((0, Mp - M), (0, Kp - K)))

    n_i, n_j, n_k = Mp // tm, Np // tn, Kp // tk
    multi_k = n_k > 1
    has_scale = scale_p is not None
    kernel = functools.partial(_mm_fused_kernel, relu=relu,
                               has_scale=has_scale, multi_k=multi_k)

    in_specs = [
        pl.BlockSpec((tm, tk), lambda i, j, k: (i, k)),
        pl.BlockSpec((tk, tn), lambda i, j, k: (k, j)),
    ]
    operands = [ap, b_p]
    if has_scale:
        in_specs.append(pl.BlockSpec((1, tn), lambda i, j, k: (0, j)))
        operands.append(scale_p)
    in_specs.append(pl.BlockSpec((1, tn), lambda i, j, k: (0, j)))
    operands.append(shift_p)

    scratch_shapes = [pltpu.VMEM((tm, tn), jnp.float32)] if multi_k else []

    # A's block index (i, k) is constant across j when n_k == 1 -> streamed once;
    # with multiple K steps it is re-streamed once per N block.
    a_streams = n_j if multi_k else 1
    out_itemsize = jnp.dtype(out_dtype).itemsize
    bytes_accessed = (2 * Mp * Kp * a_streams
                      + b_p.dtype.itemsize * Kp * Np
                      + out_itemsize * Mp * Np
                      + (8 if has_scale else 4) * Np)

    out = pl.pallas_call(
        kernel,
        out_shape=jax.ShapeDtypeStruct((Mp, Np), out_dtype),
        grid=(n_i, n_j, n_k),
        in_specs=in_specs,
        out_specs=pl.BlockSpec((tm, tn), lambda i, j, k: (i, j)),
        scratch_shapes=scratch_shapes,
        compiler_params=pltpu.CompilerParams(
            dimension_semantics=("parallel", "parallel", "arbitrary"),
            vmem_limit_bytes=_vmem_limit_bytes()),
        cost_estimate=pl.CostEstimate(
            flops=2 * Mp * Np * Kp, transcendentals=0,
            bytes_accessed=bytes_accessed),
    )(*operands)
    return out[:M, :n_out]


# ---------------------------------------------------------------------------
# Layer wrappers
# ---------------------------------------------------------------------------

def conv_bn_relu_packed(x, p):
    """Conv2d + BatchNorm2d(eval) + ReLU via bf16 patch extraction + fused Pallas matmul."""
    patches = jax.lax.conv_general_dilated_patches(
        x, filter_shape=(p["kh"], p["kw"]),
        window_strides=(p["stride"], p["stride"]),
        padding=[(p["pad"], p["pad"]), (p["pad"], p["pad"])],
        dimension_numbers=("NHWC", "HWIO", "NHWC"))
    N, OH, OW, K = patches.shape            # feature dim ordered channel-major: (c, kh, kw)
    col = patches.reshape(N * OH * OW, K)
    y = fused_matmul_packed(col, p["w_p"], None, p["shift_p"], p["oc"],
                            relu=True, tn=p["tn"], tk=p["tk"],
                            out_dtype=jnp.bfloat16)     # bf16 writeback between layers
    return y.reshape(N, OH, OW, p["oc"])


def linear_packed(x, p):
    return fused_matmul_packed(x, p["w_p"], p["scale_p"], p["shift_p"], p["n_out"],
                               relu=p["relu"], tn=p["tn"], tk=p["tk"],
                               out_dtype=jnp.float32)


def maxpool_3x3_s2(x):
    """nn.MaxPool2d(kernel_size=3, stride=2) on NHWC: two-pass max of strided slices."""
    N, H, W, C = x.shape
    OH = (H - 3) // 2 + 1
    OW = (W - 3) // 2 + 1
    t = jnp.maximum(jnp.maximum(x[:, :, 0:2 * OW - 1:2, :],
                                x[:, :, 1:2 * OW:2, :]),
                    x[:, :, 2:2 * OW + 1:2, :])
    y = jnp.maximum(jnp.maximum(t[:, 0:2 * OH - 1:2, :, :],
                                t[:, 1:2 * OH:2, :, :]),
                    t[:, 2:2 * OH + 1:2, :, :])
    return y


def adaptive_avg_pool_nhwc(x, out_h, out_w):
    """nn.AdaptiveAvgPool2d semantics (torch window formula), plain-JAX glue."""
    N, H, W, C = x.shape
    if H == out_h and W == out_w:
        return x
    rows = []
    for i in range(out_h):
        h0, h1 = (i * H) // out_h, -((-(i + 1) * H) // out_h)
        cols = []
        for j in range(out_w):
            w0, w1 = (j * W) // out_w, -((-(j + 1) * W) // out_w)
            cols.append(jnp.mean(x[:, h0:h1, w0:w1, :].astype(jnp.float32), axis=(1, 2)))
        rows.append(jnp.stack(cols, axis=1))
    return jnp.stack(rows, axis=1).astype(x.dtype)


# ---------------------------------------------------------------------------
# Model: parameters, one-time packing, forward
# ---------------------------------------------------------------------------

_CONV_CFG = [  # (in_ch, out_ch, kernel, stride, pad)
    (3, 96, 11, 4, 2),
    (96, 256, 5, 1, 2),
    (256, 384, 3, 1, 1),
    (384, 384, 3, 1, 1),
    (384, 256, 3, 1, 1),
]
_FC_CFG = [(256 * 6 * 6, 4096), (4096, 4096), (4096, 1000)]


def init_params(key):
    """f32 master parameters (PyTorch-equivalent shapes/semantics)."""
    convs = []
    for (ic, oc, k, s, p) in _CONV_CFG:
        key, k1, k2, k3, k4, k5, k6 = jax.random.split(key, 7)
        fan_in = ic * k * k
        convs.append(dict(
            W=jax.random.normal(k1, (k, k, ic, oc), jnp.float32) / jnp.sqrt(fan_in),
            b=0.01 * jax.random.normal(k2, (oc,), jnp.float32),
            gamma=1.0 + 0.1 * jax.random.normal(k3, (oc,), jnp.float32),
            beta=0.01 * jax.random.normal(k4, (oc,), jnp.float32),
            mean=0.01 * jax.random.normal(k5, (oc,), jnp.float32),
            var=1.0 + 0.1 * jax.random.uniform(k6, (oc,), jnp.float32),
            stride=s, pad=p))
    fcs = []
    for (din, dout) in _FC_CFG:
        key, k1, k2 = jax.random.split(key, 3)
        fcs.append(dict(
            W=jax.random.normal(k1, (din, dout), jnp.float32) / jnp.sqrt(din),
            b=0.01 * jax.random.normal(k2, (dout,), jnp.float32)))
    return dict(convs=convs, fcs=fcs)


def prepare_params(params, eps=1e-5):
    """One-time packing: fold BN into conv weights, im2col K-order, pad, bf16 conv / int8 FC."""
    packed_convs = []
    for c in params["convs"]:
        KH, KW, IC, OC = c["W"].shape
        K = IC * KH * KW
        scale = c["gamma"] / jnp.sqrt(c["var"] + eps)
        shift = c["beta"] + scale * (c["b"] - c["mean"])
        # conv_general_dilated_patches orders the feature dim channel-major: (c, kh, kw).
        # BN scale (per output column) is folded directly into the weights.
        w2 = jnp.transpose(c["W"], (2, 0, 1, 3)).reshape(K, OC) * scale[None, :]
        Kp = _ceil_to(K, 128)
        Np = _ceil_to(OC, 128)
        tn = _pick_tn(Np)
        tk = _pick_tk(Kp, tn, 2)
        packed_convs.append(dict(
            w_p=jnp.pad(w2, ((0, Kp - K), (0, Np - OC))).astype(jnp.bfloat16),
            shift_p=jnp.pad(shift, (0, Np - OC)).reshape(1, Np).astype(jnp.float32),
            kh=KH, kw=KW, stride=c["stride"], pad=c["pad"],
            oc=OC, tn=tn, tk=tk))

    packed_fcs = []
    n_fc = len(params["fcs"])
    for li, f in enumerate(params["fcs"]):
        K, N = f["W"].shape
        Kp = _ceil_to(K, 128)
        Np = _ceil_to(N, 128)
        tn = _pick_tn(Np)
        tk = _pick_tk(Kp, tn, 1)
        # Weight-only int8 with per-output-column scale (dequant scale applied in epilogue).
        col_scale = jnp.maximum(jnp.max(jnp.abs(f["W"]), axis=0), 1e-8) / 127.0
        w_q = jnp.clip(jnp.round(f["W"] / col_scale[None, :]), -127, 127).astype(jnp.int8)
        packed_fcs.append(dict(
            w_p=jnp.pad(w_q, ((0, Kp - K), (0, Np - N))),
            scale_p=jnp.pad(col_scale, (0, Np - N)).reshape(1, Np).astype(jnp.float32),
            shift_p=jnp.pad(f["b"], (0, Np - N)).reshape(1, Np).astype(jnp.float32),
            n_out=N, relu=(li < n_fc - 1), tn=tn, tk=tk))

    return dict(convs=packed_convs, fcs=packed_fcs)


def alexnet_v1_forward(x_nchw, packed):
    # NCHW -> NHWC, cast once to bf16 (halves activation-side HBM traffic).
    x = jnp.transpose(x_nchw, (0, 2, 3, 1)).astype(jnp.bfloat16)
    c = packed["convs"]

    x = conv_bn_relu_packed(x, c[0])
    x = maxpool_3x3_s2(x)
    x = conv_bn_relu_packed(x, c[1])
    x = maxpool_3x3_s2(x)
    x = conv_bn_relu_packed(x, c[2])
    x = conv_bn_relu_packed(x, c[3])
    x = conv_bn_relu_packed(x, c[4])

    x = adaptive_avg_pool_nhwc(x, 6, 6)                            # (N, 6, 6, 256)
    # match torch's NCHW flatten order: x.view(N, 256*6*6)
    x = jnp.transpose(x, (0, 3, 1, 2)).reshape(x.shape[0], 256 * 6 * 6)

    # Dropout(0.5) -> eval-mode identity
    for p in packed["fcs"]:
        x = linear_packed(x, p)
    return x


if __name__ == "__main__":
    key = jax.random.PRNGKey(0)
    pkey, xkey = jax.random.split(key)
    params = init_params(pkey)
    packed = prepare_params(params)     # one-time weight packing, hoisted out of forward

    # 111x111 input -> conv1 27 -> pool 13 -> conv2 13 -> pool 6 -> conv3..5 at 6 -> avgpool(6,6) identity
    x = jax.random.normal(xkey, (2, 3, 111, 111), jnp.float32)

    # One-time conv1 validation: Pallas im2col matmul vs lax conv with the same bf16 folded
    # weights (guards the patch feature-ordering assumption flagged in review).
    x_nhwc = jnp.transpose(x, (0, 2, 3, 1)).astype(jnp.bfloat16)
    y_pal = conv_bn_relu_packed(x_nhwc, packed["convs"][0]).astype(jnp.float32)
    c0 = params["convs"][0]
    scale0 = c0["gamma"] / jnp.sqrt(c0["var"] + 1e-5)
    shift0 = c0["beta"] + scale0 * (c0["b"] - c0["mean"])
    w0 = (c0["W"] * scale0[None, None, None, :]).astype(jnp.bfloat16)
    y_ref = jax.lax.conv_general_dilated(
        x_nhwc, w0, window_strides=(4, 4), padding=[(2, 2), (2, 2)],
        dimension_numbers=("NHWC", "HWIO", "NHWC"),
        preferred_element_type=jnp.float32)
    y_ref = jnp.maximum(y_ref + shift0[None, None, None, :], 0.0)
    mae = jnp.mean(jnp.abs(y_pal - y_ref))
    assert bool(mae < 0.05), float(mae)

    fwd = jax.jit(lambda inp: alexnet_v1_forward(inp, packed))
    out = jax.block_until_ready(fwd(x))
    assert out.shape == (2, 1000), out.shape
    assert bool(jnp.all(jnp.isfinite(out)))
    print("KERNEL_OK")
</pallas_src>

<mosaic_0001>
module attributes {stable_mosaic.version = 11 : i64} {
  func.func @_mm_fused_kernel(%arg0: i32, %arg1: i32, %arg2: i32, %arg3: memref<248x384xbf16, #tpu.memory_space<vmem>>, %arg4: memref<384x128xbf16, #tpu.memory_space<vmem>>, %arg5: memref<1x128xf32, #tpu.memory_space<vmem>>, %arg6: memref<248x128xbf16, #tpu.memory_space<vmem>>) attributes {dimension_semantics = [#tpu.dimension_semantics<parallel>, #tpu.dimension_semantics<parallel>, #tpu.dimension_semantics<arbitrary>], iteration_bounds = array<i64: 6, 1, 1>, scalar_prefetch = 0 : i64, scratch_operands = 0 : i64, tpu.core_type = #tpu.core_type<tc>, window_params = [{transform_indices = @transform_0, window_bounds = array<i64: 248, 384>}, {transform_indices = @transform_1, window_bounds = array<i64: 384, 128>}, {transform_indices = @transform_2, window_bounds = array<i64: 1, 128>}, {transform_indices = @transform_3, window_bounds = array<i64: 248, 128>}]} {
    %c0 = arith.constant 0 : index
    %c0_0 = arith.constant 0 : index
    %0 = vector.load %arg4[%c0, %c0_0] : memref<384x128xbf16, #tpu.memory_space<vmem>>, vector<384x128xbf16>
    %c0_1 = arith.constant 0 : index
    %c0_2 = arith.constant 0 : index
    %1 = vector.load %arg3[%c0_1, %c0_2] : memref<248x384xbf16, #tpu.memory_space<vmem>>, vector<248x384xbf16>
    %cst = arith.constant dense<0.000000e+00> : vector<248x128xf32>
    %2 = tpu.matmul %1, %0, %cst {dimension_numbers = #tpu.dot_dimension_numbers<[1], [0], [0], [1], [0, 0, 1, 1], [], []>} : vector<248x384xbf16>, vector<384x128xbf16>, vector<248x128xf32> -> vector<248x128xf32>
    %c0_3 = arith.constant 0 : index
    %c0_4 = arith.constant 0 : index
    %3 = vector.load %arg5[%c0_3, %c0_4] : memref<1x128xf32, #tpu.memory_space<vmem>>, vector<1x128xf32>
    %4 = vector.broadcast %3 : vector<1x128xf32> to vector<248x128xf32>
    %5 = arith.addf %2, %4 : vector<248x128xf32>
    %cst_5 = arith.constant 0.000000e+00 : f32
    %6 = vector.broadcast %cst_5 : f32 to vector<248x128xf32>
    %7 = arith.maximumf %5, %6 : vector<248x128xf32>
    %8 = arith.truncf %7 : vector<248x128xf32> to vector<248x128xbf16>
    %c0_6 = arith.constant 0 : index
    %c0_7 = arith.constant 0 : index
    %9 = vector.load %arg6[%c0_6, %c0_7] : memref<248x128xbf16, #tpu.memory_space<vmem>>, vector<248x128xbf16>
    tpu.vector_store %arg6[%c0_6, %c0_7], %8 {strides = array<i32>} : memref<248x128xbf16, #tpu.memory_space<vmem>>, vector<248x128xbf16>,
    return
  }
  func.func @transform_0(%arg0: i32, %arg1: i32, %arg2: i32) -> (i32, i32) {
    %c0_i32 = arith.constant 0 : i32
    return %arg0, %arg2 : i32, i32
  }
  func.func @transform_1(%arg0: i32, %arg1: i32, %arg2: i32) -> (i32, i32) {
    %c0_i32 = arith.constant 0 : i32
    return %arg2, %arg1 : i32, i32
  }
  func.func @transform_2(%arg0: i32, %arg1: i32, %arg2: i32) -> (i32, i32) {
    %c0_i32 = arith.constant 0 : i32
    %c0_i32_0 = arith.constant 0 : i32
    return %c0_i32, %arg1 : i32, i32
  }
  func.func @transform_3(%arg0: i32, %arg1: i32, %arg2: i32) -> (i32, i32) {
    %c0_i32 = arith.constant 0 : i32
    return %arg0, %arg1 : i32, i32
  }
}

</mosaic_0001>

<llo_original>
// kernel: tpu_custom_call.1
$region0: #{tpu_custom_call.1}
  #allocation0 [shape = 'u32[]', space=smem, size = 0x4, offset = 0x4, fixed_abs, tag = 'smem constant byte address 0x4 - core index']
  #allocation1 [shape = 'u32[144,128]{1,0:T(1,128)}', space=vmem, size = 0x12000, scoped, tag = 'internal scratch']
  %s0 = inlined_call_operand.hbm [shape: bf16[1488,384], index: 0, kind: input, shape index: {}]
  %s1 = inlined_call_operand.hbm [shape: bf16[384,128], index: 1, kind: input, shape index: {}]
  %s2 = inlined_call_operand.hbm [shape: f32[1,128], index: 2, kind: input, shape index: {}]
  %s3 = inlined_call_operand.hbm [shape: bf16[1488,128], index: 3, kind: output, shape index: {}]
  %s4 = sld [smem:[#allocation0]]
  $region57: #{tpu_custom_call.1} parent=0
    _
  %s6 = ssub.s32 1, %s4
  %s7 = scalar_select 0, %s6, %s4
  $region1: #{tpu_custom_call.1} parent=0
    #allocation2 [shape = 'u8[380928]{0}', space=vmem, size = 0x5d000, scoped, tag = 'input window, operand 0']
    #allocation3 [shape = 's32[2]{0}', space=sflag, size = 0x8, scoped, tag = 'scoped memory for tpu_custom_call.1']
    #allocation4 [shape = 's32[2]{0}', space=sflag, size = 0x8, scoped, tag = 'scoped memory for tpu_custom_call.1']
    #allocation5 [shape = 'u8[98304]{0}', space=vmem, size = 0x18000, scoped, tag = 'input window, operand 1, single buffered']
    #allocation6 [shape = 's32[1]{0}', space=sflag, size = 0x4, scoped, tag = 'scoped memory for tpu_custom_call.1']
    #allocation7 [shape = 'u8[512]{0}', space=vmem, size = 0x400, scoped, tag = 'input window, operand 2, single buffered']
    #allocation8 [shape = 'u8[126976]{0}', space=vmem, size = 0x1f000, scoped, tag = 'output window, operand 0']
    %8 = vsyncpa [#allocation3], 0
    %s9 = scalar_lea.sflag [#allocation3], 1
    %10 = vsyncpa %s9, 0
    %11 = vsyncpa [#allocation6], 0
    %12 = vsyncpa [#allocation4], 0
    %s13 = scalar_lea.sflag [#allocation4], 1
    %14 = vsyncpa %s13, 0
    loop: start=0, step=1, limit=8
    $region2: #{tpu_custom_call.1} parent=1 // loop_pre_header
      _
    $region3: #{tpu_custom_call.1} parent=1 // loop_header
      %s16 = sphi 0, %s20
      %p17 = scmp.ge.s32.totalorder %s16, 8
      %s23 = sphi 0, %s42
      %s24 = sphi 0, %s38
      %s25 = sphi 0, %s34
      %s26 = sphi 0, %s23
      %s27 = sphi 0, %s24
      %s28 = sphi 0, %s25
      %s29 = sphi 0, %s26
      %s30 = sphi 0, %s27
      %s31 = sphi 0, %s28
      %s47 = sphi 0, %s49
      %s50 = sphi 0, %s47
      %s51 = sphi 0, %s50
      %s67 = sphi 0, %s51
      %s75 = sphi 0, %s77
      %s78 = sphi 0, %s75
      %s79 = sphi 0, %s78
      %s95 = sphi 0, %s79
      %s101 = sphi 0, %s103
      %s104 = sphi 0, %s101
      %s105 = sphi 0, %s104
      %s121 = sphi 0, %s105
      %s129 = sphi 0, %s131
      %s132 = sphi 0, %s129
      %s133 = sphi 0, %s132
      %s149 = sphi 0, %s133
    $region4: #{tpu_custom_call.1} parent=1 // loop_header_branch
      %19 = sbr.rel (%p17) target = $region8
    $region5: #{tpu_custom_call.1} parent=1 // loop_body
      %s21 = ssub.s32 %s16, 1
      %s22 = ssub.s32 %s16, 2
      %s32 = sadd.s32 1, %s25
      %p33 = scmp.ge.s32.totalorder %s32, 1
      %s34 = scalar_select %p33, 0, %s32
      %s35 = sadd.s32 1, %s24
      %s36 = scalar_select %p33, %s35, %s24
      %p37 = scmp.ge.s32.totalorder %s36, 1
      %s38 = scalar_select %p37, 0, %s36
      %s39 = sadd.s32 1, %s23
      %s40 = scalar_select %p37, %s39, %s23
      %p41 = scmp.ge.s32.totalorder %s40, 6
      %s42 = scalar_select %p41, 0, %s40
      %s43 = ssub.s32 %s23, %s42
      %s44 = ssub.s32 %s25, %s34
      %s45 = sor.u32 %s43, %s44
      %p46 = scmp.eq.s32.totalorder %s45, 0
      %s48 = sadd.s32 %s47, 1
      %s49 = scalar_select %p46, %s47, %s48
      %p52 = pneg %p46
      %p53 = scmp.eq.s32.totalorder %s16, 5
      %p54 = por %p52, %p53
      %p55 = scmp.ne.s32.totalorder %s47, %s50
      %p56 = scmp.eq.s32.totalorder %s16, 0
      %p57 = por %p55, %p56
      %p58 = scmp.ne.s32.totalorder %s47, %s50
      %p59 = scmp.eq.s32.totalorder %s21, 5
      %p60 = por %p58, %p59
      %p61 = scmp.ne.s32.totalorder %s50, %s51
      %p62 = scmp.eq.s32.totalorder %s21, 0
      %p63 = por %p61, %p62
      %p64 = scmp.ne.s32.totalorder %s50, %s51
      %p65 = scmp.eq.s32.totalorder %s22, 5
      %p66 = por %p64, %p65
      %p68 = scmp.ne.s32.totalorder %s51, %s67
      %p69 = scmp.eq.s32.totalorder %s22, 0
      %p70 = por %p68, %p69
      %s71 = ssub.s32 %s25, %s34
      %s72 = ssub.s32 %s24, %s38
      %s73 = sor.u32 %s71, %s72
      %p74 = scmp.eq.s32.totalorder %s73, 0
      %s76 = sadd.s32 %s75, 1
      %s77 = scalar_select %p74, %s75, %s76
      %p80 = pneg %p74
      %p81 = scmp.eq.s32.totalorder %s16, 5
      %p82 = por %p80, %p81
      %p83 = scmp.ne.s32.totalorder %s75, %s78
      %p84 = scmp.eq.s32.totalorder %s16, 0
      %p85 = por %p83, %p84
      %p86 = scmp.ne.s32.totalorder %s75, %s78
      %p87 = scmp.eq.s32.totalorder %s21, 5
      %p88 = por %p86, %p87
      %p89 = scmp.ne.s32.totalorder %s78, %s79
      %p90 = scmp.eq.s32.totalorder %s21, 0
      %p91 = por %p89, %p90
      %p92 = scmp.ne.s32.totalorder %s78, %s79
      %p93 = scmp.eq.s32.totalorder %s22, 5
      %p94 = por %p92, %p93
      %p96 = scmp.ne.s32.totalorder %s79, %s95
      %p97 = scmp.eq.s32.totalorder %s22, 0
      %p98 = por %p96, %p97
      %s99 = ssub.s32 %s24, %s38
      %p100 = scmp.eq.s32.totalorder %s99, 0
      %s102 = sadd.s32 %s101, 1
      %s103 = scalar_select %p100, %s101, %s102
      %p106 = pneg %p100
      %p107 = scmp.eq.s32.totalorder %s16, 5
      %p108 = por %p106, %p107
      %p109 = scmp.ne.s32.totalorder %s101, %s104
      %p110 = scmp.eq.s32.totalorder %s16, 0
      %p111 = por %p109, %p110
      %p112 = scmp.ne.s32.totalorder %s101, %s104
      %p113 = scmp.eq.s32.totalorder %s21, 5
      %p114 = por %p112, %p113
      %p115 = scmp.ne.s32.totalorder %s104, %s105
      %p116 = scmp.eq.s32.totalorder %s21, 0
      %p117 = por %p115, %p116
      %p118 = scmp.ne.s32.totalorder %s104, %s105
      %p119 = scmp.eq.s32.totalorder %s22, 5
      %p120 = por %p118, %p119
      %p122 = scmp.ne.s32.totalorder %s105, %s121
      %p123 = scmp.eq.s32.totalorder %s22, 0
      %p124 = por %p122, %p123
      %s125 = ssub.s32 %s23, %s42
      %s126 = ssub.s32 %s24, %s38
      %s127 = sor.u32 %s125, %s126
      %p128 = scmp.eq.s32.totalorder %s127, 0
      %s130 = sadd.s32 %s129, 1
      %s131 = scalar_select %p128, %s129, %s130
      %p134 = pneg %p128
      %p135 = scmp.eq.s32.totalorder %s16, 5
      %p136 = por %p134, %p135
      %p137 = scmp.ne.s32.totalorder %s129, %s132
      %p138 = scmp.eq.s32.totalorder %s16, 0
      %p139 = por %p137, %p138
      %p140 = scmp.ne.s32.totalorder %s129, %s132
      %p141 = scmp.eq.s32.totalorder %s21, 5
      %p142 = por %p140, %p141
      %p143 = scmp.ne.s32.totalorder %s132, %s133
      %p144 = scmp.eq.s32.totalorder %s21, 0
      %p145 = por %p143, %p144
      %p146 = scmp.ne.s32.totalorder %s132, %s133
      %p147 = scmp.eq.s32.totalorder %s22, 5
      %p148 = por %p146, %p147
      %p150 = scmp.ne.s32.totalorder %s133, %s149
      %p151 = scmp.eq.s32.totalorder %s22, 0
      %p152 = por %p150, %p151
      %p153 = scmp.le.s32.totalorder 1, %s16
      %p154 = scmp.lt.s32.totalorder %s16, 7
      %p155 = pnand %p153, %p154
      %p156 = pneg %p155
      // Predicated region
      $region9: #{tpu_custom_call.1} parent=5 // pred_check
        _
      $region10: #{tpu_custom_call.1} parent=5 // pred_check_branch
        %158 = sbr.rel (%p155) target = $region12
      $region11: #{tpu_custom_call.1} parent=5 // pred_region
        %s159 = ssub.s32 %s16, 1
        // Predicated region
        $region13: #{tpu_custom_call.1} parent=11 // pred_check
          %p160 = pneg %p91
        $region14: #{tpu_custom_call.1} parent=11 // pred_check_branch
          %162 = sbr.rel (%p160) target = $region16
        $region15: #{tpu_custom_call.1} parent=11 // pred_region
          %s163 = smul.u32 48, %s28
          %s165 = ssub.s32 3072, 3072
          %166 = vsyncadd [#allocation6], %s165
          %s167 = sadd.s32 %s27, %s163
          %s168 = smul.addr %s167, 64
          %s169 = scalar_lea.hbm %s1, %s168
          %s170 = sshll.u32 [#allocation5], 4
          %s171 = int_to_ptr.vmem [resolvable:$true] %s170
          %176 = dma.hbm_to_vmem [thread:$0]  %s169, 3072, %s171, [#allocation6], 64, 64, 4
        $region16: #{tpu_custom_call.1} parent=11 // pred_fallthru
          _
        // Predicated region
        $region17: #{tpu_custom_call.1} parent=11 // pred_check
          %p177 = pneg %p117
        $region18: #{tpu_custom_call.1} parent=11 // pred_check_branch
          %179 = sbr.rel (%p177) target = $region20
        $region19: #{tpu_custom_call.1} parent=11 // pred_region
          %s181 = ssub.s32 16, 16
          %182 = vsyncadd [#allocation6], %s181
          %s183 = smul.addr %s27, 16
          %s184 = scalar_lea.hbm %s2, %s183
          %s186 = sshll.u32 [#allocation7], 4
          %s187 = int_to_ptr.vmem [resolvable:$true] %s186
          %189 = dma.hbm_to_vmem [thread:$0]  %s184, 16, %s187, [#allocation6]
        $region20: #{tpu_custom_call.1} parent=11 // pred_fallthru
          _
      $region12: #{tpu_custom_call.1} parent=5 // pred_fallthru
        _
      %p190 = scmp.lt.s32.totalorder %s16, 6
      // Predicated region
      $region21: #{tpu_custom_call.1} parent=5 // pred_check
        %p191 = pneg %p190
      $region22: #{tpu_custom_call.1} parent=5 // pred_check_branch
        %193 = sbr.rel (%p191) target = $region24
      $region23: #{tpu_custom_call.1} parent=5 // pred_region
        // Predicated region
        $region25: #{tpu_custom_call.1} parent=23 // pred_check
          %p194 = pneg %p57
        $region26: #{tpu_custom_call.1} parent=23 // pred_check_branch
          %196 = sbr.rel (%p194) target = $region28
        $region27: #{tpu_custom_call.1} parent=23 // pred_region
          %s197 = sand.u32 %s47, 1
          %s198 = scalar_lea.sflag [#allocation3], %s197
          %s199 = sand.u32 %s47, 1
          %s200 = smul.addr %s199, 372
          %s201 = scalar_lea.vmem [#allocation2], %s200
          %s202 = smul.u32 31, %s23
          %s203 = smul.u32 3, %s25
          %s205 = ssub.s32 5952, 5952
          %206 = vsyncadd %s198, %s205
          %s207 = smul.addr %s202, 3
          %s208 = sadd.s32 %s203, %s207
          %s209 = smul.addr %s208, 64
          %s210 = scalar_lea.hbm %s0, %s209
          %s211 = sshll.u32 %s201, 4
          %s212 = int_to_ptr.vmem [resolvable:$true] %s211
          %217 = dma.hbm_to_vmem [thread:$0]  %s210, 5952, %s212, %s198, 192, 192, 12
        $region28: #{tpu_custom_call.1} parent=23 // pred_fallthru
          _
      $region24: #{tpu_custom_call.1} parent=5 // pred_fallthru
        _
      %p218 = scmp.le.s32.totalorder 1, %s16
      %p219 = scmp.lt.s32.totalorder %s16, 7
      %p220 = pnand %p218, %p219
      %p221 = pneg %p220
      // Predicated region
      $region29: #{tpu_custom_call.1} parent=5 // pred_check
        _
      $region30: #{tpu_custom_call.1} parent=5 // pred_check_branch
        %223 = sbr.rel (%p220) target = $region32
      $region31: #{tpu_custom_call.1} parent=5 // pred_region
        %s224 = ssub.s32 %s16, 1
        %s225 = sand.u32 %s50, 1
        %s226 = scalar_lea.sflag [#allocation3], %s225
        %s227 = sand.u32 %s50, 1
        %s228 = smul.addr %s227, 372
        %s229 = scalar_lea.vmem [#allocation2], %s228
        // Predicated region
        $region33: #{tpu_custom_call.1} parent=31 // pred_check
          %p230 = pneg %p63
        $region34: #{tpu_custom_call.1} parent=31 // pred_check_branch
          %232 = sbr.rel (%p230) target = $region36
        $region35: #{tpu_custom_call.1} parent=31 // pred_region
          %233 = dma.done %s226, 5952
        $region36: #{tpu_custom_call.1} parent=31 // pred_fallthru
          _
        // Predicated region
        $region37: #{tpu_custom_call.1} parent=31 // pred_check
          %p234 = pneg %p91
        $region38: #{tpu_custom_call.1} parent=31 // pred_check_branch
          %236 = sbr.rel (%p234) target = $region40
        $region39: #{tpu_custom_call.1} parent=31 // pred_region
          %237 = dma.done [#allocation6], 3072
        $region40: #{tpu_custom_call.1} parent=31 // pred_fallthru
          _
        // Predicated region
        $region41: #{tpu_custom_call.1} parent=31 // pred_check
          %p238 = pneg %p117
        $region42: #{tpu_custom_call.1} parent=31 // pred_check_branch
          %240 = sbr.rel (%p238) target = $region44
        $region43: #{tpu_custom_call.1} parent=31 // pred_region
          %241 = dma.done [#allocation6], 16
        $region44: #{tpu_custom_call.1} parent=31 // pred_fallthru
          _
        %s242 = sand.u32 %s50, 1
        %s243 = scalar_lea.sflag [#allocation3], %s242
        %s244 = sand.u32 %s50, 1
        %s245 = smul.addr %s244, 372
        %s246 = scalar_lea.vmem [#allocation2], %s245
        %p247 = pneg %p63
        %p248 = pneg %p60
        %p249 = pneg %p91
        %p250 = pneg %p88
        %p251 = pneg %p117
        %p252 = pneg %p114
        %p253 = pneg %p145
        %p254 = pneg %p142
        %s255 = sand.u32 %s132, 1
        %s256 = scalar_lea.sflag [#allocation4], %s255
        %s257 = sand.u32 %s132, 1
        %s258 = smul.addr %s257, 124
        %s259 = scalar_lea.vmem [#allocation8], %s258
        %s260 = smul.u32 31, %s26
        %s261 = smul.u32 3, %s28
        %s262 = smul.u32 48, %s28
        %s263 = smul.u32 31, %s26
        %v265 = vld [vmem:[#allocation5] sm:$0xf]
        %v266 = vld [vmem:[#allocation5 + $0x4] sm:$0xf]
        %v267 = vld [vmem:[#allocation5 + $0x8] sm:$0xf]
        %v268 = vld [vmem:[#allocation5 + $0xc] sm:$0xf]
        %v269 = vld [vmem:[#allocation5 + $0x10] sm:$0xf]
        %v270 = vld [vmem:[#allocation5 + $0x14] sm:$0xf]
        %v271 = vld [vmem:[#allocation5 + $0x18] sm:$0xf]
        %v272 = vld [vmem:[#allocation5 + $0x1c] sm:$0xf]
        %v273 = vld [vmem:[#allocation5 + $0x20] sm:$0xf]
        %v274 = vld [vmem:[#allocation5 + $0x24] sm:$0xf]
        %v275 = vld [vmem:[#allocation5 + $0x28] sm:$0xf]
        %v276 = vld [vmem:[#allocation5 + $0x2c] sm:$0xf]
        %v277 = vld [vmem:[#allocation5 + $0x30] sm:$0xf]
        %v278 = vld [vmem:[#allocation5 + $0x34] sm:$0xf]
        %v279 = vld [vmem:[#allocation5 + $0x38] sm:$0xf]
        %v280 = vld [vmem:[#allocation5 + $0x3c] sm:$0xf]
        %v281 = vld [vmem:[#allocation5 + $0x40] sm:$0xf]
        %v282 = vld [vmem:[#allocation5 + $0x44] sm:$0xf]
        %v283 = vld [vmem:[#allocation5 + $0x48] sm:$0xf]
        %v284 = vld [vmem:[#allocation5 + $0x4c] sm:$0xf]
        %v285 = vld [vmem:[#allocation5 + $0x50] sm:$0xf]
        %v286 = vld [vmem:[#allocation5 + $0x54] sm:$0xf]
        %v287 = vld [vmem:[#allocation5 + $0x58] sm:$0xf]
        %v288 = vld [vmem:[#allocation5 + $0x5c] sm:$0xf]
        %v289 = vld [vmem:[#allocation5 + $0x60] sm:$0xf]
        %v290 = vld [vmem:[#allocation5 + $0x64] sm:$0xf]
        %v291 = vld [vmem:[#allocation5 + $0x68] sm:$0xf]
        %v292 = vld [vmem:[#allocation5 + $0x6c] sm:$0xf]
        %v293 = vld [vmem:[#allocation5 + $0x70] sm:$0xf]
        %v294 = vld [vmem:[#allocation5 + $0x74] sm:$0xf]
        %v295 = vld [vmem:[#allocation5 + $0x78] sm:$0xf]
        %v296 = vld [vmem:[#allocation5 + $0x7c] sm:$0xf]
        %v297 = vld [vmem:[#allocation5 + $0x80] sm:$0xf]
        %v298 = vld [vmem:[#allocation5 + $0x84] sm:$0xf]
        %v299 = vld [vmem:[#allocation5 + $0x88] sm:$0xf]
        %v300 = vld [vmem:[#allocation5 + $0x8c] sm:$0xf]
        %v301 = vld [vmem:[#allocation5 + $0x90] sm:$0xf]
        %v302 = vld [vmem:[#allocation5 + $0x94] sm:$0xf]
        %v303 = vld [vmem:[#allocation5 + $0x98] sm:$0xf]
        %v304 = vld [vmem:[#allocation5 + $0x9c] sm:$0xf]
        %v305 = vld [vmem:[#allocation5 + $0xa0] sm:$0xf]
        %v306 = vld [vmem:[#allocation5 + $0xa4] sm:$0xf]
        %v307 = vld [vmem:[#allocation5 + $0xa8] sm:$0xf]
        %v308 = vld [vmem:[#allocation5 + $0xac] sm:$0xf]
        %v309 = vld [vmem:[#allocation5 + $0xb0] sm:$0xf]
        %v310 = vld [vmem:[#allocation5 + $0xb4] sm:$0xf]
        %v311 = vld [vmem:[#allocation5 + $0xb8] sm:$0xf]
        %v312 = vld [vmem:[#allocation5 + $0xbc] sm:$0xf]
        %v313 = vld [vmem:[%s229] sm:$0xff]
        %v314 = vld [vmem:[%s229 + $0x8] sm:$0xf]
        %v315 = vld [vmem:[%s229 + $0xc] sm:$0xff]
        %v316 = vld [vmem:[%s229 + $0x14] sm:$0xf]
        %v317 = vld [vmem:[%s229 + $0x18] sm:$0xff]
        %v318 = vld [vmem:[%s229 + $0x20] sm:$0xf]
        %v319 = vld [vmem:[%s229 + $0x24] sm:$0xff]
        %v320 = vld [vmem:[%s229 + $0x2c] sm:$0xf]
        %v321 = vld [vmem:[%s229 + $0x30] sm:$0xff]
        %v322 = vld [vmem:[%s229 + $0x38] sm:$0xf]
        %v323 = vld [vmem:[%s229 + $0x3c] sm:$0xff]
        %v324 = vld [vmem:[%s229 + $0x44] sm:$0xf]
        %v325 = vld [vmem:[%s229 + $0x48] sm:$0xff]
        %v326 = vld [vmem:[%s229 + $0x50] sm:$0xf]
        %v327 = vld [vmem:[%s229 + $0x54] sm:$0xff]
        %v328 = vld [vmem:[%s229 + $0x5c] sm:$0xf]
        %v329 = vld [vmem:[%s229 + $0x60] sm:$0xff]
        %v330 = vld [vmem:[%s229 + $0x68] sm:$0xf]
        %v331 = vld [vmem:[%s229 + $0x6c] sm:$0xff]
        %v332 = vld [vmem:[%s229 + $0x74] sm:$0xf]
        %v333 = vld [vmem:[%s229 + $0x78] sm:$0xff]
        %v334 = vld [vmem:[%s229 + $0x80] sm:$0xf]
        %v335 = vld [vmem:[%s229 + $0x84] sm:$0xff]
        %v336 = vld [vmem:[%s229 + $0x8c] sm:$0xf]
        %v337 = vld [vmem:[%s229 + $0x90] sm:$0xff]
        %v338 = vld [vmem:[%s229 + $0x98] sm:$0xf]
        %v339 = vld [vmem:[%s229 + $0x9c] sm:$0xff]
        %v340 = vld [vmem:[%s229 + $0xa4] sm:$0xf]
        %v341 = vld [vmem:[%s229 + $0xa8] sm:$0xff]
        %v342 = vld [vmem:[%s229 + $0xb0] sm:$0xf]
        %v343 = vld [vmem:[%s229 + $0xb4] sm:$0xff]
        %v344 = vld [vmem:[%s229 + $0xbc] sm:$0xf]
        %v345 = vld [vmem:[%s229 + $0xc0] sm:$0xff]
        %v346 = vld [vmem:[%s229 + $0xc8] sm:$0xf]
        %v347 = vld [vmem:[%s229 + $0xcc] sm:$0xff]
        %v348 = vld [vmem:[%s229 + $0xd4] sm:$0xf]
        %v349 = vld [vmem:[%s229 + $0xd8] sm:$0xff]
        %v350 = vld [vmem:[%s229 + $0xe0] sm:$0xf]
        %v351 = vld [vmem:[%s229 + $0xe4] sm:$0xff]
        %v352 = vld [vmem:[%s229 + $0xec] sm:$0xf]
        %v353 = vld [vmem:[%s229 + $0xf0] sm:$0xff]
        %v354 = vld [vmem:[%s229 + $0xf8] sm:$0xf]
        %v355 = vld [vmem:[%s229 + $0xfc] sm:$0xff]
        %v356 = vld [vmem:[%s229 + $0x104] sm:$0xf]
        %v357 = vld [vmem:[%s229 + $0x108] sm:$0xff]
        %v358 = vld [vmem:[%s229 + $0x110] sm:$0xf]
        %v359 = vld [vmem:[%s229 + $0x114] sm:$0xff]
        %v360 = vld [vmem:[%s229 + $0x11c] sm:$0xf]
        %v361 = vld [vmem:[%s229 + $0x120] sm:$0xff]
        %v362 = vld [vmem:[%s229 + $0x128] sm:$0xf]
        %v363 = vld [vmem:[%s229 + $0x12c] sm:$0xff]
        %v364 = vld [vmem:[%s229 + $0x134] sm:$0xf]
        %v365 = vld [vmem:[%s229 + $0x138] sm:$0xff]
        %v366 = vld [vmem:[%s229 + $0x140] sm:$0xf]
        %v367 = vld [vmem:[%s229 + $0x144] sm:$0xff]
        %v368 = vld [vmem:[%s229 + $0x14c] sm:$0xf]
        %v369 = vld [vmem:[%s229 + $0x150] sm:$0xff]
        %v370 = vld [vmem:[%s229 + $0x158] sm:$0xf]
        %v371 = vld [vmem:[%s229 + $0x15c] sm:$0xff]
        %v372 = vld [vmem:[%s229 + $0x164] sm:$0xf]
        %v373 = vld [vmem:[%s229 + $0x168] sm:$0xff]
        %v374 = vld [vmem:[%s229 + $0x170] sm:$0xf]
        %v375 = vld [vmem:[#allocation7] sm:$0x1]
        %v377 = vlaneseq
        %v378 = vshrl.u32 %v377, 7
        %v379 = vsub.s32 0, %v378
        %v380 = vrot.slane %v375, %v379
        %v444 = vunpack.c.l.b16 %v313
        %v445 = vunpack.c.h.b16 %v313
        %v446 = vunpack.c.l.b16 %v314
        %v447 = vunpack.c.l.b16 %v315
        %v448 = vunpack.c.h.b16 %v315
        %v449 = vunpack.c.l.b16 %v316
        %v450 = vunpack.c.l.b16 %v317
        %v451 = vunpack.c.h.b16 %v317
        %v452 = vunpack.c.l.b16 %v318
        %v453 = vunpack.c.l.b16 %v319
        %v454 = vunpack.c.h.b16 %v319
        %v455 = vunpack.c.l.b16 %v320
        %v456 = vunpack.c.l.b16 %v321
        %v457 = vunpack.c.h.b16 %v321
        %v458 = vunpack.c.l.b16 %v322
        %v459 = vunpack.c.l.b16 %v323
        %v460 = vunpack.c.h.b16 %v323
        %v461 = vunpack.c.l.b16 %v324
        %v462 = vunpack.c.l.b16 %v325
        %v463 = vunpack.c.h.b16 %v325
        %v464 = vunpack.c.l.b16 %v326
        %v465 = vunpack.c.l.b16 %v327
        %v466 = vunpack.c.h.b16 %v327
        %v467 = vunpack.c.l.b16 %v328
        %v468 = vunpack.c.l.b16 %v329
        %v469 = vunpack.c.h.b16 %v329
        %v470 = vunpack.c.l.b16 %v330
        %v471 = vunpack.c.l.b16 %v331
        %v472 = vunpack.c.h.b16 %v331
        %v473 = vunpack.c.l.b16 %v332
        %v474 = vunpack.c.l.b16 %v333
        %v475 = vunpack.c.h.b16 %v333
        %v476 = vunpack.c.l.b16 %v334
        %v477 = vunpack.c.l.b16 %v335
        %v478 = vunpack.c.h.b16 %v335
        %v479 = vunpack.c.l.b16 %v336
        %v480 = vunpack.c.l.b16 %v337
        %v481 = vunpack.c.h.b16 %v337
        %v482 = vunpack.c.l.b16 %v338
        %v483 = vunpack.c.l.b16 %v339
        %v484 = vunpack.c.h.b16 %v339
        %v485 = vunpack.c.l.b16 %v340
        %v486 = vunpack.c.l.b16 %v341
        %v487 = vunpack.c.h.b16 %v341
        %v488 = vunpack.c.l.b16 %v342
        %v489 = vunpack.c.l.b16 %v343
        %v490 = vunpack.c.h.b16 %v343
        %v491 = vunpack.c.l.b16 %v344
        %v492 = vunpack.c.l.b16 %v345
        %v493 = vunpack.c.h.b16 %v345
        %v494 = vunpack.c.l.b16 %v346
        %v495 = vunpack.c.l.b16 %v347
        %v496 = vunpack.c.h.b16 %v347
        %v497 = vunpack.c.l.b16 %v348
        %v498 = vunpack.c.l.b16 %v349
        %v499 = vunpack.c.h.b16 %v349
        %v500 = vunpack.c.l.b16 %v350
        %v501 = vunpack.c.l.b16 %v351
        %v502 = vunpack.c.h.b16 %v351
        %v503 = vunpack.c.l.b16 %v352
        %v504 = vunpack.c.l.b16 %v353
        %v505 = vunpack.c.h.b16 %v353
        %v506 = vunpack.c.l.b16 %v354
        %v507 = vunpack.c.l.b16 %v355
        %v508 = vunpack.c.h.b16 %v355
        %v509 = vunpack.c.l.b16 %v356
        %v510 = vunpack.c.l.b16 %v357
        %v511 = vunpack.c.h.b16 %v357
        %v512 = vunpack.c.l.b16 %v358
        %v513 = vunpack.c.l.b16 %v359
        %v514 = vunpack.c.h.b16 %v359
        %v515 = vunpack.c.l.b16 %v360
        %v516 = vunpack.c.l.b16 %v361
        %v517 = vunpack.c.h.b16 %v361
        %v518 = vunpack.c.l.b16 %v362
        %v519 = vunpack.c.l.b16 %v363
        %v520 = vunpack.c.h.b16 %v363
        %v521 = vunpack.c.l.b16 %v364
        %v522 = vunpack.c.l.b16 %v365
        %v523 = vunpack.c.h.b16 %v365
        %v524 = vunpack.c.l.b16 %v366
        %v525 = vunpack.c.l.b16 %v367
        %v526 = vunpack.c.h.b16 %v367
        %v527 = vunpack.c.l.b16 %v368
        %v528 = vunpack.c.l.b16 %v369
        %v529 = vunpack.c.h.b16 %v369
        %v530 = vunpack.c.l.b16 %v370
        %v531 = vunpack.c.l.b16 %v371
        %v532 = vunpack.c.h.b16 %v371
        %v533 = vunpack.c.l.b16 %v372
        %v534 = vunpack.c.l.b16 %v373
        %v535 = vunpack.c.h.b16 %v373
        %v536 = vunpack.c.l.b16 %v374
        %v537 = vpack.c.b16 %v447, %v444
        %v538 = vpack.c.b16 %v448, %v445
        %v539 = vpack.c.b16 %v449, %v446
        %v540 = vpack.c.b16 %v453, %v450
        %v541 = vpack.c.b16 %v454, %v451
        %v542 = vpack.c.b16 %v455, %v452
        %v543 = vpack.c.b16 %v459, %v456
        %v544 = vpack.c.b16 %v460, %v457
        %v545 = vpack.c.b16 %v461, %v458
        %v546 = vpack.c.b16 %v465, %v462
        %v547 = vpack.c.b16 %v466, %v463
        %v548 = vpack.c.b16 %v467, %v464
        %v549 = vpack.c.b16 %v471, %v468
        %v550 = vpack.c.b16 %v472, %v469
        %v551 = vpack.c.b16 %v473, %v470
        %v552 = vpack.c.b16 %v477, %v474
        %v553 = vpack.c.b16 %v478, %v475
        %v554 = vpack.c.b16 %v479, %v476
        %v555 = vpack.c.b16 %v483, %v480
        %v556 = vpack.c.b16 %v484, %v481
        %v557 = vpack.c.b16 %v485, %v482
        %v558 = vpack.c.b16 %v489, %v486
        %v559 = vpack.c.b16 %v490, %v487
        %v560 = vpack.c.b16 %v491, %v488
        %v561 = vpack.c.b16 %v495, %v492
        %v562 = vpack.c.b16 %v496, %v493
        %v563 = vpack.c.b16 %v497, %v494
        %v564 = vpack.c.b16 %v501, %v498
        %v565 = vpack.c.b16 %v502, %v499
        %v566 = vpack.c.b16 %v503, %v500
        %v567 = vpack.c.b16 %v507, %v504
        %v568 = vpack.c.b16 %v508, %v505
        %v569 = vpack.c.b16 %v509, %v506
        %v570 = vpack.c.b16 %v513, %v510
        %v571 = vpack.c.b16 %v514, %v511
        %v572 = vpack.c.b16 %v515, %v512
        %v573 = vpack.c.b16 %v519, %v516
        %v574 = vpack.c.b16 %v520, %v517
        %v575 = vpack.c.b16 %v521, %v518
        %v576 = vpack.c.b16 %v525, %v522
        %v577 = vpack.c.b16 %v526, %v523
        %v578 = vpack.c.b16 %v527, %v524
        %v579 = vpack.c.b16 %v531, %v528
        %v580 = vpack.c.b16 %v532, %v529
        %v581 = vpack.c.b16 %v533, %v530
        %v582 = vpack.c.b16 %v534, %v534
        %v583 = vpack.c.b16 %v535, %v535
        %v584 = vpack.c.b16 %v536, %v536
        %v681 = vunpack.c.l.b16 %v265
        %v682 = vunpack.c.l.b16 %v266
        %v683 = vunpack.c.l.b16 %v267
        %v684 = vunpack.c.l.b16 %v268
        %v685 = vunpack.c.l.b16 %v269
        %v686 = vunpack.c.l.b16 %v270
        %v687 = vunpack.c.l.b16 %v271
        %v688 = vunpack.c.l.b16 %v272
        %v689 = vunpack.c.l.b16 %v273
        %v690 = vunpack.c.l.b16 %v274
        %v691 = vunpack.c.l.b16 %v275
        %v692 = vunpack.c.l.b16 %v276
        %v693 = vunpack.c.l.b16 %v277
        %v694 = vunpack.c.l.b16 %v278
        %v695 = vunpack.c.l.b16 %v279
        %v696 = vunpack.c.l.b16 %v280
        %v697 = vunpack.c.l.b16 %v281
        %v698 = vunpack.c.l.b16 %v282
        %v699 = vunpack.c.l.b16 %v283
        %v700 = vunpack.c.l.b16 %v284
        %v701 = vunpack.c.l.b16 %v285
        %v702 = vunpack.c.l.b16 %v286
        %v703 = vunpack.c.l.b16 %v287
        %v704 = vunpack.c.l.b16 %v288
        %v705 = vunpack.c.l.b16 %v289
        %v706 = vunpack.c.l.b16 %v290
        %v707 = vunpack.c.l.b16 %v291
        %v708 = vunpack.c.l.b16 %v292
        %v709 = vunpack.c.l.b16 %v293
        %v710 = vunpack.c.l.b16 %v294
        %v711 = vunpack.c.l.b16 %v295
        %v712 = vunpack.c.l.b16 %v296
        %v713 = vunpack.c.l.b16 %v297
        %v714 = vunpack.c.l.b16 %v298
        %v715 = vunpack.c.l.b16 %v299
        %v716 = vunpack.c.l.b16 %v300
        %v717 = vunpack.c.l.b16 %v301
        %v718 = vunpack.c.l.b16 %v302
        %v719 = vunpack.c.l.b16 %v303
        %v720 = vunpack.c.l.b16 %v304
        %v721 = vunpack.c.l.b16 %v305
        %v722 = vunpack.c.l.b16 %v306
        %v723 = vunpack.c.l.b16 %v307
        %v724 = vunpack.c.l.b16 %v308
        %v725 = vunpack.c.l.b16 %v309
        %v726 = vunpack.c.l.b16 %v310
        %v727 = vunpack.c.l.b16 %v311
        %v728 = vunpack.c.l.b16 %v312
        %v729 = vpack.c.b16 %v682, %v681
        %v730 = vpack.c.b16 %v684, %v683
        %v731 = vpack.c.b16 %v686, %v685
        %v732 = vpack.c.b16 %v688, %v687
        %v733 = vpack.c.b16 %v690, %v689
        %v734 = vpack.c.b16 %v692, %v691
        %v735 = vpack.c.b16 %v694, %v693
        %v736 = vpack.c.b16 %v696, %v695
        %v737 = vpack.c.b16 %v698, %v697
        %v738 = vpack.c.b16 %v700, %v699
        %v739 = vpack.c.b16 %v702, %v701
        %v740 = vpack.c.b16 %v704, %v703
        %v741 = vpack.c.b16 %v706, %v705
        %v742 = vpack.c.b16 %v708, %v707
        %v743 = vpack.c.b16 %v710, %v709
        %v744 = vpack.c.b16 %v712, %v711
        %v745 = vpack.c.b16 %v714, %v713
        %v746 = vpack.c.b16 %v716, %v715
        %v747 = vpack.c.b16 %v718, %v717
        %v748 = vpack.c.b16 %v720, %v719
        %v749 = vpack.c.b16 %v722, %v721
        %v750 = vpack.c.b16 %v724, %v723
        %v751 = vpack.c.b16 %v726, %v725
        %v752 = vpack.c.b16 %v728, %v727
        %777 = vmatprep.subr.bf16.mxu0 0
        %778 = vmatpush1.bf16.msra.mxu0 %v729
        %779 = vmatprep.subr.bf16.mxu0 0
        %780 = vmatpush1.bf16.msra.mxu0 %v730
        %781 = vmatprep.subr.bf16.mxu0 0
        %782 = vmatpush1.bf16.msra.mxu0 %v731
        %783 = vmatprep.subr.bf16.mxu0 0
        %784 = vmatpush1.bf16.msra.mxu0 %v732
        %785 = vmatprep.subr.bf16.mxu0 0
        %786 = vmatpush1.bf16.msra.mxu0 %v733
        %787 = vmatprep.subr.bf16.mxu0 0
        %788 = vmatpush1.bf16.msra.mxu0 %v734
        %789 = vmatprep.subr.bf16.mxu0 0
        %790 = vmatpush1.bf16.msra.mxu0 %v735
        %791 = vmatprep.subr.bf16.mxu0 0
        %792 = vmatpush1.bf16.msra.mxu0 %v736
        %793 = vmatprep.subr.bf16.mxu0 0
        %794 = vmatpush1.bf16.msra.mxu0 %v737
        %795 = vmatprep.subr.bf16.mxu0 0
        %796 = vmatpush1.bf16.msra.mxu0 %v738
        %797 = vmatprep.subr.bf16.mxu0 0
        %798 = vmatpush1.bf16.msra.mxu0 %v739
        %799 = vmatprep.subr.bf16.mxu0 0
        %800 = vmatpush1.bf16.msra.mxu0 %v740
        %801 = vmatprep.subr.bf16.mxu0 0
        %802 = vmatpush1.bf16.msra.mxu0 %v741
        %803 = vmatprep.subr.bf16.mxu0 0
        %804 = vmatpush1.bf16.msra.mxu0 %v742
        %805 = vmatprep.subr.bf16.mxu0 0
        %806 = vmatpush1.bf16.msra.mxu0 %v743
        %807 = vmatprep.subr.bf16.mxu0 0
        %808 = vmatpush1.bf16.msra.mxu0 %v744
        %809 = vmatprep.mubr.bf16.mxu0 %v538
        %810 = vmatmul.mubr.bf16.gmra.mrb[0].mxu0 %v537
        %v811 = vpop.f32.mrb[0].mxu0
        %v812 = vadd.f32 %v380, %v811
        %v813 = vpop.f32.mrb[0].mxu0
        %v814 = vpop.f32.mrb[0].mxu0
        %v815 = vadd.f32 %v380, %v814
        %v816 = vpop.f32.mrb[0].mxu0
        %817 = vmatprep.mubr.bf16.mxu0 %v541
        %818 = vmatmul.mubr.bf16.gmra.mrb[0].mxu0 %v540
        %v819 = vpop.f32.mrb[0].mxu0
        %v820 = vadd.f32 %v380, %v819
        %v821 = vpop.f32.mrb[0].mxu0
        %v822 = vpop.f32.mrb[0].mxu0
        %v823 = vadd.f32 %v380, %v822
        %v824 = vpop.f32.mrb[0].mxu0
        %825 = vmatprep.mubr.bf16.mxu0 %v544
        %826 = vmatmul.mubr.bf16.gmra.mrb[0].mxu0 %v543
        %v827 = vpop.f32.mrb[0].mxu0
        %v828 = vadd.f32 %v380, %v827
        %v829 = vpop.f32.mrb[0].mxu0
        %v830 = vpop.f32.mrb[0].mxu0
        %v831 = vadd.f32 %v380, %v830
        %v832 = vpop.f32.mrb[0].mxu0
        %833 = vmatprep.mubr.bf16.mxu0 %v547
        %834 = vmatmul.mubr.bf16.gmra.mrb[0].mxu0 %v546
        %v835 = vpop.f32.mrb[0].mxu0
        %v836 = vadd.f32 %v380, %v835
        %v837 = vpop.f32.mrb[0].mxu0
        %v838 = vpop.f32.mrb[0].mxu0
        %v839 = vadd.f32 %v380, %v838
        %v840 = vpop.f32.mrb[0].mxu0
        %841 = vmatprep.mubr.bf16.mxu0 %v550
        %842 = vmatmul.mubr.bf16.gmra.mrb[0].mxu0 %v549
        %v843 = vpop.f32.mrb[0].mxu0
        %v844 = vadd.f32 %v380, %v843
        %v845 = vpop.f32.mrb[0].mxu0
        %v846 = vpop.f32.mrb[0].mxu0
        %v847 = vadd.f32 %v380, %v846
        %v848 = vpop.f32.mrb[0].mxu0
        %849 = vmatprep.mubr.bf16.mxu0 %v553
        %850 = vmatmul.mubr.bf16.gmra.mrb[0].mxu0 %v552
        %v851 = vpop.f32.mrb[0].mxu0
        %v852 = vadd.f32 %v380, %v851
        %v853 = vpop.f32.mrb[0].mxu0
        %v854 = vpop.f32.mrb[0].mxu0
        %v855 = vadd.f32 %v380, %v854
        %v856 = vpop.f32.mrb[0].mxu0
        %857 = vmatprep.mubr.bf16.mxu0 %v556
        %858 = vmatmul.mubr.bf16.gmra.mrb[0].mxu0 %v555
        %v859 = vpop.f32.mrb[0].mxu0
        %v860 = vadd.f32 %v380, %v859
        %v861 = vpop.f32.mrb[0].mxu0
        %v862 = vpop.f32.mrb[0].mxu0
        %v863 = vadd.f32 %v380, %v862
        %v864 = vpop.f32.mrb[0].mxu0
        %865 = vmatprep.mubr.bf16.mxu0 %v559
        %866 = vmatmul.mubr.bf16.gmra.mrb[0].mxu0 %v558
        %v867 = vpop.f32.mrb[0].mxu0
        %v868 = vadd.f32 %v380, %v867
        %v869 = vpop.f32.mrb[0].mxu0
        %v870 = vpop.f32.mrb[0].mxu0
        %v871 = vadd.f32 %v380, %v870
        %v872 = vpop.f32.mrb[0].mxu0
        %873 = vmatprep.mubr.bf16.mxu0 %v562
        %874 = vmatmul.mubr.bf16.gmra.mrb[0].mxu0 %v561
        %v875 = vpop.f32.mrb[0].mxu0
        %v876 = vadd.f32 %v380, %v875
        %v877 = vpop.f32.mrb[0].mxu0
        %v878 = vpop.f32.mrb[0].mxu0
        %v879 = vadd.f32 %v380, %v878
        %v880 = vpop.f32.mrb[0].mxu0
        %881 = vmatprep.mubr.bf16.mxu0 %v565
        %882 = vmatmul.mubr.bf16.gmra.mrb[0].mxu0 %v564
        %v883 = vpop.f32.mrb[0].mxu0
        %v884 = vadd.f32 %v380, %v883
        %v885 = vpop.f32.mrb[0].mxu0
        %v886 = vpop.f32.mrb[0].mxu0
        %v887 = vadd.f32 %v380, %v886
        %v888 = vpop.f32.mrb[0].mxu0
        %889 = vmatprep.mubr.bf16.mxu0 %v568
        %890 = vmatmul.mubr.bf16.gmra.mrb[0].mxu0 %v567
        %v891 = vpop.f32.mrb[0].mxu0
        %v892 = vadd.f32 %v380, %v891
        %v893 = vpop.f32.mrb[0].mxu0
        %v894 = vpop.f32.mrb[0].mxu0
        %v895 = vadd.f32 %v380, %v894
        %v896 = vpop.f32.mrb[0].mxu0
        %897 = vmatprep.mubr.bf16.mxu0 %v571
        %898 = vmatmul.mubr.bf16.gmra.mrb[0].mxu0 %v570
        %v899 = vpop.f32.mrb[0].mxu0
        %v900 = vadd.f32 %v380, %v899
        %v901 = vpop.f32.mrb[0].mxu0
        %v902 = vpop.f32.mrb[0].mxu0
        %v903 = vadd.f32 %v380, %v902
        %v904 = vpop.f32.mrb[0].mxu0
        %905 = vmatprep.mubr.bf16.mxu0 %v574
        %906 = vmatmul.mubr.bf16.gmra.mrb[0].mxu0 %v573
        %v907 = vpop.f32.mrb[0].mxu0
        %v908 = vadd.f32 %v380, %v907
        %v909 = vpop.f32.mrb[0].mxu0
        %v910 = vpop.f32.mrb[0].mxu0
        %v911 = vadd.f32 %v380, %v910
        %v912 = vpop.f32.mrb[0].mxu0
        %913 = vmatprep.mubr.bf16.mxu0 %v577
        %914 = vmatmul.mubr.bf16.gmra.mrb[0].mxu0 %v576
        %v915 = vpop.f32.mrb[0].mxu0
        %v916 = vadd.f32 %v380, %v915
        %v917 = vpop.f32.mrb[0].mxu0
        %v918 = vpop.f32.mrb[0].mxu0
        %v919 = vadd.f32 %v380, %v918
        %v920 = vpop.f32.mrb[0].mxu0
        %921 = vmatprep.mubr.bf16.mxu0 %v580
        %922 = vmatmul.mubr.bf16.gmra.mrb[0].mxu0 %v579
        %v923 = vpop.f32.mrb[0].mxu0
        %v924 = vadd.f32 %v380, %v923
        %v925 = vpop.f32.mrb[0].mxu0
        %v926 = vpop.f32.mrb[0].mxu0
        %v927 = vadd.f32 %v380, %v926
        %v928 = vpop.f32.mrb[0].mxu0
        %929 = vmatprep.mubr.bf16.mxu0 %v583
        %930 = vmatmul.mubr.bf16.gmra.mrb[0].mxu0 %v582
        %v931 = vpop.f32.mrb[0].mxu0
        %v932 = vadd.f32 %v380, %v931
        %v933 = vpop.f32.mrb[0].mxu0
        %v934 = vpop.f32.mrb[0].mxu0
        %v935 = vpop.f32.mrb[0].mxu0
        %936 = vdwg.mxu0
        %937 = vmatprep.subr.bf16.mxu0 0
        %938 = vmatpush1.bf16.msra.mxu0 %v745
        %939 = vmatprep.subr.bf16.mxu0 0
        %940 = vmatpush1.bf16.msra.mxu0 %v746
        %941 = vmatprep.subr.bf16.mxu0 0
        %942 = vmatpush1.bf16.msra.mxu0 %v747
        %943 = vmatprep.subr.bf16.mxu0 0
        %944 = vmatpush1.bf16.msra.mxu0 %v748
        %945 = vmatprep.subr.bf16.mxu0 0
        %946 = vmatpush1.bf16.msra.mxu0 %v749
        %947 = vmatprep.subr.bf16.mxu0 0
        %948 = vmatpush1.bf16.msra.mxu0 %v750
        %949 = vmatprep.subr.bf16.mxu0 0
        %950 = vmatpush1.bf16.msra.mxu0 %v751
        %951 = vmatprep.subr.bf16.mxu0 0
        %952 = vmatpush1.bf16.msra.mxu0 %v752
        %953 = vmatprep.subr.bf16.mxu0 0
        %954 = vmatpush1.bf16.msra.mxu0 0
        %955 = vmatprep.subr.bf16.mxu0 0
        %956 = vmatpush1.bf16.msra.mxu0 0
        %957 = vmatprep.subr.bf16.mxu0 0
        %958 = vmatpush1.bf16.msra.mxu0 0
        %959 = vmatprep.subr.bf16.mxu0 0
        %960 = vmatpush1.bf16.msra.mxu0 0
        %961 = vmatprep.subr.bf16.mxu0 0
        %962 = vmatpush1.bf16.msra.mxu0 0
        %963 = vmatprep.subr.bf16.mxu0 0
        %964 = vmatpush1.bf16.msra.mxu0 0
        %965 = vmatprep.subr.bf16.mxu0 0
        %966 = vmatpush1.bf16.msra.mxu0 0
        %967 = vmatprep.subr.bf16.mxu0 0
        %968 = vmatpush1.bf16.msra.mxu0 0
        %969 = vmatprep.mubr.bf16.mxu0 0
        %970 = vmatmul.mubr.bf16.gmra.mrb[0].mxu0 %v539
        %v971 = vpop.f32.mrb[0].mxu0
        %v972 = vadd.f32 %v812, %v971
        %v973 = vpop.f32.mrb[0].mxu0
        %v974 = vpop.f32.mrb[0].mxu0
        %v975 = vadd.f32 %v815, %v974
        %v976 = vpop.f32.mrb[0].mxu0
        %977 = vmatprep.mubr.bf16.mxu0 0
        %978 = vmatmul.mubr.bf16.gmra.mrb[0].mxu0 %v542
        %v979 = vpop.f32.mrb[0].mxu0
        %v980 = vadd.f32 %v820, %v979
        %v981 = vpop.f32.mrb[0].mxu0
        %v982 = vpop.f32.mrb[0].mxu0
        %v983 = vadd.f32 %v823, %v982
        %v984 = vpop.f32.mrb[0].mxu0
        %985 = vmatprep.mubr.bf16.mxu0 0
        %986 = vmatmul.mubr.bf16.gmra.mrb[0].mxu0 %v545
        %v987 = vpop.f32.mrb[0].mxu0
        %v988 = vadd.f32 %v828, %v987
        %v989 = vpop.f32.mrb[0].mxu0
        %v990 = vpop.f32.mrb[0].mxu0
        %v991 = vadd.f32 %v831, %v990
        %v992 = vpop.f32.mrb[0].mxu0
        %993 = vmatprep.mubr.bf16.mxu0 0
        %994 = vmatmul.mubr.bf16.gmra.mrb[0].mxu0 %v548
        %v995 = vpop.f32.mrb[0].mxu0
        %v996 = vadd.f32 %v836, %v995
        %v997 = vpop.f32.mrb[0].mxu0
        %v998 = vpop.f32.mrb[0].mxu0
        %v999 = vadd.f32 %v839, %v998
        %v1000 = vpop.f32.mrb[0].mxu0
        %1001 = vmatprep.mubr.bf16.mxu0 0
        %1002 = vmatmul.mubr.bf16.gmra.mrb[0].mxu0 %v551
        %v1003 = vpop.f32.mrb[0].mxu0
        %v1004 = vadd.f32 %v844, %v1003
        %v1005 = vpop.f32.mrb[0].mxu0
        %v1006 = vpop.f32.mrb[0].mxu0
        %v1007 = vadd.f32 %v847, %v1006
        %v1008 = vpop.f32.mrb[0].mxu0
        %1009 = vmatprep.mubr.bf16.mxu0 0
        %1010 = vmatmul.mubr.bf16.gmra.mrb[0].mxu0 %v554
        %v1011 = vpop.f32.mrb[0].mxu0
        %v1012 = vadd.f32 %v852, %v1011
        %v1013 = vpop.f32.mrb[0].mxu0
        %v1014 = vpop.f32.mrb[0].mxu0
        %v1015 = vadd.f32 %v855, %v1014
        %v1016 = vpop.f32.mrb[0].mxu0
        %1017 = vmatprep.mubr.bf16.mxu0 0
        %1018 = vmatmul.mubr.bf16.gmra.mrb[0].mxu0 %v557
        %v1019 = vpop.f32.mrb[0].mxu0
        %v1020 = vadd.f32 %v860, %v1019
        %v1021 = vpop.f32.mrb[0].mxu0
        %v1022 = vpop.f32.mrb[0].mxu0
        %v1023 = vadd.f32 %v863, %v1022
        %v1024 = vpop.f32.mrb[0].mxu0
        %1025 = vmatprep.mubr.bf16.mxu0 0
        %1026 = vmatmul.mubr.bf16.gmra.mrb[0].mxu0 %v560
        %v1027 = vpop.f32.mrb[0].mxu0
        %v1028 = vadd.f32 %v868, %v1027
        %v1029 = vpop.f32.mrb[0].mxu0
        %v1030 = vpop.f32.mrb[0].mxu0
        %v1031 = vadd.f32 %v871, %v1030
        %v1032 = vpop.f32.mrb[0].mxu0
        %1033 = vmatprep.mubr.bf16.mxu0 0
        %1034 = vmatmul.mubr.bf16.gmra.mrb[0].mxu0 %v563
        %v1035 = vpop.f32.mrb[0].mxu0
        %v1036 = vadd.f32 %v876, %v1035
        %v1037 = vpop.f32.mrb[0].mxu0
        %v1038 = vpop.f32.mrb[0].mxu0
        %v1039 = vadd.f32 %v879, %v1038
        %v1040 = vpop.f32.mrb[0].mxu0
        %1041 = vmatprep.mubr.bf16.mxu0 0
        %1042 = vmatmul.mubr.bf16.gmra.mrb[0].mxu0 %v566
        %v1043 = vpop.f32.mrb[0].mxu0
        %v1044 = vadd.f32 %v884, %v1043
        %v1045 = vpop.f32.mrb[0].mxu0
        %v1046 = vpop.f32.mrb[0].mxu0
        %v1047 = vadd.f32 %v887, %v1046
        %v1048 = vpop.f32.mrb[0].mxu0
        %1049 = vmatprep.mubr.bf16.mxu0 0
        %1050 = vmatmul.mubr.bf16.gmra.mrb[0].mxu0 %v569
        %v1051 = vpop.f32.mrb[0].mxu0
        %v1052 = vadd.f32 %v892, %v1051
        %v1053 = vpop.f32.mrb[0].mxu0
        %v1054 = vpop.f32.mrb[0].mxu0
        %v1055 = vadd.f32 %v895, %v1054
        %v1056 = vpop.f32.mrb[0].mxu0
        %1057 = vmatprep.mubr.bf16.mxu0 0
        %1058 = vmatmul.mubr.bf16.gmra.mrb[0].mxu0 %v572
        %v1059 = vpop.f32.mrb[0].mxu0
        %v1060 = vadd.f32 %v900, %v1059
        %v1061 = vpop.f32.mrb[0].mxu0
        %v1062 = vpop.f32.mrb[0].mxu0
        %v1063 = vadd.f32 %v903, %v1062
        %v1064 = vpop.f32.mrb[0].mxu0
        %1065 = vmatprep.mubr.bf16.mxu0 0
        %1066 = vmatmul.mubr.bf16.gmra.mrb[0].mxu0 %v575
        %v1067 = vpop.f32.mrb[0].mxu0
        %v1068 = vadd.f32 %v908, %v1067
        %v1069 = vpop.f32.mrb[0].mxu0
        %v1070 = vpop.f32.mrb[0].mxu0
        %v1071 = vadd.f32 %v911, %v1070
        %v1072 = vpop.f32.mrb[0].mxu0
        %1073 = vmatprep.mubr.bf16.mxu0 0
        %1074 = vmatmul.mubr.bf16.gmra.mrb[0].mxu0 %v578
        %v1075 = vpop.f32.mrb[0].mxu0
        %v1076 = vadd.f32 %v916, %v1075
        %v1077 = vpop.f32.mrb[0].mxu0
        %v1078 = vpop.f32.mrb[0].mxu0
        %v1079 = vadd.f32 %v919, %v1078
        %v1080 = vpop.f32.mrb[0].mxu0
        %1081 = vmatprep.mubr.bf16.mxu0 0
        %1082 = vmatmul.mubr.bf16.gmra.mrb[0].mxu0 %v581
        %v1083 = vpop.f32.mrb[0].mxu0
        %v1084 = vadd.f32 %v924, %v1083
        %v1085 = vpop.f32.mrb[0].mxu0
        %v1086 = vpop.f32.mrb[0].mxu0
        %v1087 = vadd.f32 %v927, %v1086
        %v1088 = vpop.f32.mrb[0].mxu0
        %1089 = vmatprep.mubr.bf16.mxu0 0
        %1090 = vmatmul.mubr.bf16.gmra.mrb[0].mxu0 %v584
        %v1091 = vpop.f32.mrb[0].mxu0
        %v1092 = vadd.f32 %v932, %v1091
        %v1093 = vpop.f32.mrb[0].mxu0
        %v1094 = vpop.f32.mrb[0].mxu0
        %v1095 = vpop.f32.mrb[0].mxu0
        %1096 = vdwg.mxu0
        %v1097 = vmax.f32 %v972, 0.0
        %v1098 = vmax.f32 %v975, 0.0
        %v1099 = vmax.f32 %v980, 0.0
        %v1100 = vmax.f32 %v983, 0.0
        %v1101 = vmax.f32 %v988, 0.0
        %v1102 = vmax.f32 %v991, 0.0
        %v1103 = vmax.f32 %v996, 0.0
        %v1104 = vmax.f32 %v999, 0.0
        %v1105 = vmax.f32 %v1004, 0.0
        %v1106 = vmax.f32 %v1007, 0.0
        %v1107 = vmax.f32 %v1012, 0.0
        %v1108 = vmax.f32 %v1015, 0.0
        %v1109 = vmax.f32 %v1020, 0.0
        %v1110 = vmax.f32 %v1023, 0.0
        %v1111 = vmax.f32 %v1028, 0.0
        %v1112 = vmax.f32 %v1031, 0.0
        %v1113 = vmax.f32 %v1036, 0.0
        %v1114 = vmax.f32 %v1039, 0.0
        %v1115 = vmax.f32 %v1044, 0.0
        %v1116 = vmax.f32 %v1047, 0.0
        %v1117 = vmax.f32 %v1052, 0.0
        %v1118 = vmax.f32 %v1055, 0.0
        %v1119 = vmax.f32 %v1060, 0.0
        %v1120 = vmax.f32 %v1063, 0.0
        %v1121 = vmax.f32 %v1068, 0.0
        %v1122 = vmax.f32 %v1071, 0.0
        %v1123 = vmax.f32 %v1076, 0.0
        %v1124 = vmax.f32 %v1079, 0.0
        %v1125 = vmax.f32 %v1084, 0.0
        %v1126 = vmax.f32 %v1087, 0.0
        %v1127 = vmax.f32 %v1092, 0.0
        %v1128 = vpack.c.bf16 %v1098, %v1097
        %v1129 = vpack.c.bf16 %v1100, %v1099
        %v1130 = vpack.c.bf16 %v1102, %v1101
        %v1131 = vpack.c.bf16 %v1104, %v1103
        %v1132 = vpack.c.bf16 %v1106, %v1105
        %v1133 = vpack.c.bf16 %v1108, %v1107
        %v1134 = vpack.c.bf16 %v1110, %v1109
        %v1135 = vpack.c.bf16 %v1112, %v1111
        %v1136 = vpack.c.bf16 %v1114, %v1113
        %v1137 = vpack.c.bf16 %v1116, %v1115
        %v1138 = vpack.c.bf16 %v1118, %v1117
        %v1139 = vpack.c.bf16 %v1120, %v1119
        %v1140 = vpack.c.bf16 %v1122, %v1121
        %v1141 = vpack.c.bf16 %v1124, %v1123
        %v1142 = vpack.c.bf16 %v1126, %v1125
        %v1143 = vpack.c.bf16 %v1127, %v1127
        %v1160 = vunpack.c.l.b16 %v1128
        %v1161 = vunpack.c.h.b16 %v1128
        %v1162 = vunpack.c.l.b16 %v1129
        %v1163 = vunpack.c.h.b16 %v1129
        %v1164 = vunpack.c.l.b16 %v1130
        %v1165 = vunpack.c.h.b16 %v1130
        %v1166 = vunpack.c.l.b16 %v1131
        %v1167 = vunpack.c.h.b16 %v1131
        %v1168 = vunpack.c.l.b16 %v1132
        %v1169 = vunpack.c.h.b16 %v1132
        %v1170 = vunpack.c.l.b16 %v1133
        %v1171 = vunpack.c.h.b16 %v1133
        %v1172 = vunpack.c.l.b16 %v1134
        %v1173 = vunpack.c.h.b16 %v1134
        %v1174 = vunpack.c.l.b16 %v1135
        %v1175 = vunpack.c.h.b16 %v1135
        %v1176 = vunpack.c.l.b16 %v1136
        %v1177 = vunpack.c.h.b16 %v1136
        %v1178 = vunpack.c.l.b16 %v1137
        %v1179 = vunpack.c.h.b16 %v1137
        %v1180 = vunpack.c.l.b16 %v1138
        %v1181 = vunpack.c.h.b16 %v1138
        %v1182 = vunpack.c.l.b16 %v1139
        %v1183 = vunpack.c.h.b16 %v1139
        %v1184 = vunpack.c.l.b16 %v1140
        %v1185 = vunpack.c.h.b16 %v1140
        %v1186 = vunpack.c.l.b16 %v1141
        %v1187 = vunpack.c.h.b16 %v1141
        %v1188 = vunpack.c.l.b16 %v1142
        %v1189 = vunpack.c.h.b16 %v1142
        %v1190 = vunpack.c.l.b16 %v1143
        %v1191 = vpack.c.b16 %v1160, %v1160
        %v1192 = vpack.c.b16 %v1161, %v1161
        %v1193 = vpack.c.b16 %v1162, %v1162
        %v1194 = vpack.c.b16 %v1163, %v1163
        %v1195 = vpack.c.b16 %v1164, %v1164
        %v1196 = vpack.c.b16 %v1165, %v1165
        %v1197 = vpack.c.b16 %v1166, %v1166
        %v1198 = vpack.c.b16 %v1167, %v1167
        %v1199 = vpack.c.b16 %v1168, %v1168
        %v1200 = vpack.c.b16 %v1169, %v1169
        %v1201 = vpack.c.b16 %v1170, %v1170
        %v1202 = vpack.c.b16 %v1171, %v1171
        %v1203 = vpack.c.b16 %v1172, %v1172
        %v1204 = vpack.c.b16 %v1173, %v1173
        %v1205 = vpack.c.b16 %v1174, %v1174
        %v1206 = vpack.c.b16 %v1175, %v1175
        %v1207 = vpack.c.b16 %v1176, %v1176
        %v1208 = vpack.c.b16 %v1177, %v1177
        %v1209 = vpack.c.b16 %v1178, %v1178
        %v1210 = vpack.c.b16 %v1179, %v1179
        %v1211 = vpack.c.b16 %v1180, %v1180
        %v1212 = vpack.c.b16 %v1181, %v1181
        %v1213 = vpack.c.b16 %v1182, %v1182
        %v1214 = vpack.c.b16 %v1183, %v1183
        %v1215 = vpack.c.b16 %v1184, %v1184
        %v1216 = vpack.c.b16 %v1185, %v1185
        %v1217 = vpack.c.b16 %v1186, %v1186
        %v1218 = vpack.c.b16 %v1187, %v1187
        %v1219 = vpack.c.b16 %v1188, %v1188
        %v1220 = vpack.c.b16 %v1189, %v1189
        %v1221 = vpack.c.b16 %v1190, %v1190
        %1253 = vst [vmem:[%s259] sm:$0xf] %v1191
        %1254 = vst [vmem:[%s259 + $0x4] sm:$0xf] %v1192
        %1255 = vst [vmem:[%s259 + $0x8] sm:$0xf] %v1193
        %1256 = vst [vmem:[%s259 + $0xc] sm:$0xf] %v1194
        %1257 = vst [vmem:[%s259 + $0x10] sm:$0xf] %v1195
        %1258 = vst [vmem:[%s259 + $0x14] sm:$0xf] %v1196
        %1259 = vst [vmem:[%s259 + $0x18] sm:$0xf] %v1197
        %1260 = vst [vmem:[%s259 + $0x1c] sm:$0xf] %v1198
        %1261 = vst [vmem:[%s259 + $0x20] sm:$0xf] %v1199
        %1262 = vst [vmem:[%s259 + $0x24] sm:$0xf] %v1200
        %1263 = vst [vmem:[%s259 + $0x28] sm:$0xf] %v1201
        %1264 = vst [vmem:[%s259 + $0x2c] sm:$0xf] %v1202
        %1265 = vst [vmem:[%s259 + $0x30] sm:$0xf] %v1203
        %1266 = vst [vmem:[%s259 + $0x34] sm:$0xf] %v1204
        %1267 = vst [vmem:[%s259 + $0x38] sm:$0xf] %v1205
        %1268 = vst [vmem:[%s259 + $0x3c] sm:$0xf] %v1206
        %1269 = vst [vmem:[%s259 + $0x40] sm:$0xf] %v1207
        %1270 = vst [vmem:[%s259 + $0x44] sm:$0xf] %v1208
        %1271 = vst [vmem:[%s259 + $0x48] sm:$0xf] %v1209
        %1272 = vst [vmem:[%s259 + $0x4c] sm:$0xf] %v1210
        %1273 = vst [vmem:[%s259 + $0x50] sm:$0xf] %v1211
        %1274 = vst [vmem:[%s259 + $0x54] sm:$0xf] %v1212
        %1275 = vst [vmem:[%s259 + $0x58] sm:$0xf] %v1213
        %1276 = vst [vmem:[%s259 + $0x5c] sm:$0xf] %v1214
        %1277 = vst [vmem:[%s259 + $0x60] sm:$0xf] %v1215
        %1278 = vst [vmem:[%s259 + $0x64] sm:$0xf] %v1216
        %1279 = vst [vmem:[%s259 + $0x68] sm:$0xf] %v1217
        %1280 = vst [vmem:[%s259 + $0x6c] sm:$0xf] %v1218
        %1281 = vst [vmem:[%s259 + $0x70] sm:$0xf] %v1219
        %1282 = vst [vmem:[%s259 + $0x74] sm:$0xf] %v1220
        %1283 = vst [vmem:[%s259 + $0x78] sm:$0xf] %v1221
        %s1284 = sand.u32 %s132, 1
        %s1285 = scalar_lea.sflag [#allocation4], %s1284
        %s1286 = sand.u32 %s132, 1
        %s1287 = smul.addr %s1286, 124
        %s1288 = scalar_lea.vmem [#allocation8], %s1287
        // Predicated region
        $region45: #{tpu_custom_call.1} parent=31 // pred_check
          %p1289 = pneg %p142
        $region46: #{tpu_custom_call.1} parent=31 // pred_check_branch
          %1291 = sbr.rel (%p1289) target = $region48
        $region47: #{tpu_custom_call.1} parent=31 // pred_region
          %s1292 = smul.u32 31, %s26
          %s1294 = ssub.s32 1984, 1984
          %1295 = vsyncadd %s1285, %s1294
          %s1296 = sadd.s32 %s27, %s1292
          %s1297 = smul.addr %s1296, 64
          %s1298 = scalar_lea.hbm %s3, %s1297
          %s1299 = sshll.u32 %s1288, 4
          %s1300 = int_to_ptr.vmem [resolvable:$true] %s1299
          %1305 = dma.vmem_to_hbm [thread:$0]  %s1300, 1984, %s1298, %s1285, 64, 64, 4
        $region48: #{tpu_custom_call.1} parent=31 // pred_fallthru
          _
      $region32: #{tpu_custom_call.1} parent=5 // pred_fallthru
        _
      %p1306 = scmp.le.s32.totalorder 2, %s16
      // Predicated region
      $region49: #{tpu_custom_call.1} parent=5 // pred_check
        %p1307 = pneg %p1306
      $region50: #{tpu_custom_call.1} parent=5 // pred_check_branch
        %1309 = sbr.rel (%p1307) target = $region52
      $region51: #{tpu_custom_call.1} parent=5 // pred_region
        %s1310 = ssub.s32 %s16, 2
        // Predicated region
        $region53: #{tpu_custom_call.1} parent=51 // pred_check
          %p1311 = pneg %p148
        $region54: #{tpu_custom_call.1} parent=51 // pred_check_branch
          %1313 = sbr.rel (%p1311) target = $region56
        $region55: #{tpu_custom_call.1} parent=51 // pred_region
          %s1314 = sand.u32 %s133, 1
          %s1315 = scalar_lea.sflag [#allocation4], %s1314
          %s1316 = sand.u32 %s133, 1
          %s1317 = smul.addr %s1316, 124
          %s1318 = scalar_lea.vmem [#allocation8], %s1317
          %1319 = dma.done %s1315, 1984
        $region56: #{tpu_custom_call.1} parent=51 // pred_fallthru
          _
      $region52: #{tpu_custom_call.1} parent=5 // pred_fallthru
        _
    $region6: #{tpu_custom_call.1} parent=1 // loop_footer
      %s20 = sadd.s32 1, %s16
    $region7: #{tpu_custom_call.1} parent=1 // loop_footer_branch
      %15 = sbr.rel target = $region3
    $region8: #{tpu_custom_call.1} parent=1 // loop_exit
      _
    %1320 = vsyncpa [#allocation3], 1
    %s1321 = scalar_lea.sflag [#allocation3], 1
    %1322 = vsyncpa %s1321, 1
    %1323 = vsyncpa [#allocation6], 1
    %1324 = vsyncpa [#allocation4], 1
    %s1325 = scalar_lea.sflag [#allocation4], 1
    %1326 = vsyncpa %s1325, 1

</llo_original>
